<compile_context>
chip_gen: v5e
topology: v5e:2x2
jax: 0.10.0
libtpu: 0.0.40
codegen_flags: <defaults>
</compile_context>

<pallas_src>
import functools
from typing import NamedTuple

import jax
import jax.numpy as jnp
from jax.experimental import pallas as pl
from jax.experimental.pallas import tpu as pltpu


def _round_up(x, m):
    return ((x + m - 1) // m) * m


def _cdiv(a, b):
    return -(-a // b)


def _choose_batch_tile(batch, *, row_mult=8, max_tile=512, split_threshold=256):
    """Pick a batch tile: big (amortise ~0.35us/step), low padding waste, and
    >= 2 grid steps once the batch is large enough for v7x's 2 TensorCores."""
    if batch >= 2 * max_tile:
        num_tiles = _cdiv(batch, max_tile)
    elif batch >= split_threshold:
        num_tiles = 2              # give v7x's second TC a tile to chew on
    else:
        num_tiles = 1              # tiny batch: one step, no dead rows beyond row_mult
    tb = _round_up(_cdiv(batch, num_tiles), row_mult)
    batch_pad = _round_up(batch, tb)
    return tb, batch_pad


class MultiMlpParams(NamedTuple):
    """Pre-padded / pre-fused parameters (built once, reused every forward call)."""
    w_enc_in: jax.Array      # (input_size, d_pad)  first encoder application
    w_enc_hidden: jax.Array  # (d_pad, d_pad)       subsequent shared applications
    b_enc: jax.Array         # (1, d_pad)  float32
    w_heads: jax.Array       # (d_pad, n_pad)       all heads fused along lanes
    b_heads: jax.Array       # (1, n_pad)  float32


def prepare_multimlp_params(w_enc, b_enc, head_ws, head_bs, *,
                            matmul_dtype=jnp.float32):
    """Pad/fuse MultiMlp parameters once (not on the per-call forward path)."""
    input_size, layer_size = w_enc.shape
    output_sizes = tuple(int(w.shape[1]) for w in head_ws)
    total_out = sum(output_sizes)

    # Lane-dense feature / fused-head dims. Zero padding is numerically inert.
    # (If layer_size / total_out ever exceed 128 on v6e/v7x, rounding to 256
    #  would fill the 2x256x256 MXU better; irrelevant at MuZero's 32-wide sizes.)
    d_pad = _round_up(max(layer_size, 128), 128)
    n_pad = _round_up(max(total_out, 128), 128)

    w_enc_m = w_enc.astype(matmul_dtype)
    w_enc_in = (jnp.zeros((input_size, d_pad), matmul_dtype)
                .at[:, :layer_size].set(w_enc_m))
    w_enc_hidden = (jnp.zeros((d_pad, d_pad), matmul_dtype)
                    .at[:input_size, :layer_size].set(w_enc_m))
    b_enc_p = (jnp.zeros((1, d_pad), jnp.float32)
               .at[:, :layer_size].set(b_enc.reshape(1, -1).astype(jnp.float32)))

    w_heads = jnp.concatenate(
        [w.astype(matmul_dtype).reshape(layer_size, -1) for w in head_ws], axis=1)
    b_heads = jnp.concatenate(
        [b.reshape(1, -1).astype(jnp.float32) for b in head_bs], axis=1)
    w_heads_p = (jnp.zeros((d_pad, n_pad), matmul_dtype)
                 .at[:layer_size, :total_out].set(w_heads))
    b_heads_p = (jnp.zeros((1, n_pad), jnp.float32)
                 .at[:, :total_out].set(b_heads))

    params = MultiMlpParams(w_enc_in, w_enc_hidden, b_enc_p, w_heads_p, b_heads_p)
    return params


def _multimlp_kernel(x_ref, w_in_ref, w_hid_ref, b_enc_ref, w_head_ref, b_head_ref,
                     out_ref, *, layer_num, matmul_dtype):
    """One batch tile: shared-weight encoder applied layer_num times + fused heads."""
    # First encoder application contracts over the raw (unpadded) input_size, so x
    # never needed a lane-padded HBM copy. Bias add / ReLU stay in f32 on the VPU
    # (v5e has no bf16 VPU); (1, N) bias refs broadcast along sublanes for free.
    x = x_ref[...].astype(matmul_dtype)
    h = jnp.dot(x, w_in_ref[...], preferred_element_type=jnp.float32) + b_enc_ref[...]
    h = jnp.maximum(h, 0.0)

    # Remaining applications reuse the SAME padded shared weight (matches the
    # PyTorch list-multiplication aliasing). Small static trip count -> unrolled.
    for _ in range(layer_num - 1):
        h = jnp.dot(h.astype(matmul_dtype), w_hid_ref[...],
                    preferred_element_type=jnp.float32) + b_enc_ref[...]
        h = jnp.maximum(h, 0.0)

    # All output heads fused into one lane-dense matmul + one unmasked store.
    y = (jnp.dot(h.astype(matmul_dtype), w_head_ref[...],
                 preferred_element_type=jnp.float32) + b_head_ref[...])
    out_ref[...] = y.astype(out_ref.dtype)


def multi_mlp_forward(x, params: MultiMlpParams, *, layer_num, output_sizes):
    """Full MultiMlp forward. Returns a list of per-head outputs."""
    assert layer_num >= 1
    batch, input_size = x.shape
    d_pad = params.w_enc_in.shape[1]
    n_pad = params.w_heads.shape[1]
    total_out = sum(output_sizes)
    assert params.w_enc_in.shape[0] == input_size
    matmul_dtype = params.w_enc_in.dtype
    out_dtype = x.dtype

    # bf16 refs pack 16 rows per sublane tile; f32 packs 8.
    row_mult = 16 if jnp.dtype(out_dtype).itemsize < 4 else 8
    tb, batch_pad = _choose_batch_tile(batch, row_mult=row_mult)
    if batch_pad != batch:
        # Only the batch dim is ever padded host-side (zeros -> relu(b) rows,
        # sliced away below); the feature dim goes in unpadded.
        x = jnp.pad(x, ((0, batch_pad - batch), (0, 0)))
    grid = (batch_pad // tb,)

    itemsize_x = jnp.dtype(x.dtype).itemsize
    itemsize_w = jnp.dtype(matmul_dtype).itemsize

    # Advisory cost estimate for the XLA scheduler (dtype-aware).
    flops = (2 * batch_pad * input_size * d_pad
             + 2 * batch_pad * d_pad * d_pad * (layer_num - 1)
             + 2 * batch_pad * d_pad * n_pad)
    bytes_accessed = (batch_pad * input_size * itemsize_x
                      + batch_pad * n_pad * itemsize_x
                      + (input_size * d_pad + d_pad * d_pad + d_pad * n_pad) * itemsize_w
                      + (d_pad + n_pad) * 4)

    # VMEM budget: double-buffered x/out tiles, weights (double-buffered by default
    # even with a constant index_map), biases, plus intermediate headroom.
    # Capped at 48 MiB so Mosaic keeps internal-scratch headroom under v7x's 64 MiB.
    # TODO(synk): if d_pad ever grows large, set pipeline_mode=pl.Buffered(1) on the
    # weight BlockSpecs to drop them to a single VMEM buffer.
    vmem_need = (2 * tb * input_size * itemsize_x
                 + 2 * tb * n_pad * itemsize_x
                 + 2 * (input_size * d_pad + d_pad * d_pad + d_pad * n_pad) * itemsize_w
                 + 2 * (d_pad + n_pad) * 4
                 + 6 * tb * max(d_pad, n_pad) * 4)
    vmem_limit = int(min(max(2 * vmem_need, 16 << 20), 48 << 20))

    kernel = functools.partial(_multimlp_kernel, layer_num=layer_num,
                               matmul_dtype=matmul_dtype)

    out_pad = pl.pallas_call(
        kernel,
        out_shape=jax.ShapeDtypeStruct((batch_pad, n_pad), out_dtype),
        grid=grid,
        in_specs=[
            pl.BlockSpec((tb, input_size), lambda i: (i, 0)),       # x: tiled over batch
            pl.BlockSpec((input_size, d_pad), lambda i: (0, 0)),    # encoder W (1st app)
            pl.BlockSpec((d_pad, d_pad), lambda i: (0, 0)),         # encoder W (shared)
            pl.BlockSpec((1, d_pad), lambda i: (0, 0)),             # encoder b
            pl.BlockSpec((d_pad, n_pad), lambda i: (0, 0)),         # fused head W
            pl.BlockSpec((1, n_pad), lambda i: (0, 0)),             # fused head b
        ],
        out_specs=pl.BlockSpec((tb, n_pad), lambda i: (i, 0)),
        compiler_params=pltpu.CompilerParams(
            dimension_semantics=("parallel",),
            vmem_limit_bytes=vmem_limit,
        ),
        cost_estimate=pl.CostEstimate(
            flops=flops, transcendentals=0, bytes_accessed=bytes_accessed),
    )(x, params.w_enc_in, params.w_enc_hidden, params.b_enc,
      params.w_heads, params.b_heads)

    # One slice to the valid region, then split the fused slab per head.
    out = out_pad[:batch, :total_out]
    outs, off = [], 0
    for size in output_sizes:
        outs.append(out[:, off:off + size])
        off += size
    return outs


def _reference_forward(x, w_enc, b_enc, head_ws, head_bs, layer_num):
    h = x
    for _ in range(layer_num):
        h = jnp.maximum(h @ w_enc + b_enc, 0.0)
    return [h @ w + b for w, b in zip(head_ws, head_bs)]


if __name__ == "__main__":
    # Module hyper-parameters (input_size must equal layer_size because the encoder
    # reuses one Linear layer_num times — exactly the PyTorch Sequential aliasing).
    batch = 8
    input_size = 32
    layer_size = 32
    layer_num = 2
    output_sizes = (16, 8)

    key = jax.random.PRNGKey(0)
    keys = jax.random.split(key, 3 + 2 * len(output_sizes))

    x = jax.random.normal(keys[0], (batch, input_size), dtype=jnp.float32)

    enc_scale = 1.0 / jnp.sqrt(jnp.float32(input_size))
    w_enc = jax.random.uniform(keys[1], (input_size, layer_size), jnp.float32,
                               -enc_scale, enc_scale)
    b_enc = jax.random.uniform(keys[2], (1, layer_size), jnp.float32,
                               -enc_scale, enc_scale)

    head_ws, head_bs = [], []
    head_scale = 1.0 / jnp.sqrt(jnp.float32(layer_size))
    for i, size in enumerate(output_sizes):
        head_ws.append(jax.random.uniform(keys[3 + 2 * i], (layer_size, size),
                                          jnp.float32, -head_scale, head_scale))
        head_bs.append(jax.random.uniform(keys[4 + 2 * i], (1, size),
                                          jnp.float32, -head_scale, head_scale))

    refs = _reference_forward(x, w_enc, b_enc, head_ws, head_bs, layer_num)

    forward = jax.jit(functools.partial(multi_mlp_forward, layer_num=layer_num,
                                        output_sizes=output_sizes))

    # --- f32 matmul-operand path (tight tolerance) ---
    params_f32 = prepare_multimlp_params(w_enc, b_enc, head_ws, head_bs,
                                         matmul_dtype=jnp.float32)
    outs = jax.block_until_ready(forward(x, params_f32))
    for o, r, size in zip(outs, refs, output_sizes):
        assert o.shape == (batch, size), (o.shape, (batch, size))
        assert jnp.allclose(o, r, atol=1e-5, rtol=1e-5), "f32 mismatch vs reference"

    # --- bf16 matmul-operand path (v6e/v7x MXU + bandwidth win); f32 accumulation,
    #     so only operand-rounding error compounds -> loose tolerance. ---
    params_bf16 = prepare_multimlp_params(w_enc, b_enc, head_ws, head_bs,
                                          matmul_dtype=jnp.bfloat16)
    outs_bf16 = jax.block_until_ready(forward(x, params_bf16))
    for o, r in zip(outs_bf16, refs):
        assert jnp.allclose(o, r, atol=5e-2, rtol=5e-2), "bf16 mismatch vs reference"

    # --- exercise batch-dim padding (batch not a multiple of the sublane tile) ---
    x2 = jax.random.normal(keys[0], (20, input_size), dtype=jnp.float32)
    refs2 = _reference_forward(x2, w_enc, b_enc, head_ws, head_bs, layer_num)
    outs2 = jax.block_until_ready(forward(x2, params_f32))
    for o, r in zip(outs2, refs2):
        assert jnp.allclose(o, r, atol=1e-5, rtol=1e-5), "padded-batch mismatch"

    print("KERNEL_OK")
</pallas_src>

<mosaic_0001>
module attributes {stable_mosaic.version = 11 : i64} {
  func.func @_multimlp_kernel(%arg0: i32, %arg1: memref<8x32xf32, #tpu.memory_space<vmem>>, %arg2: memref<32x128xf32, #tpu.memory_space<vmem>>, %arg3: memref<128x128xf32, #tpu.memory_space<vmem>>, %arg4: memref<1x128xf32, #tpu.memory_space<vmem>>, %arg5: memref<128x128xf32, #tpu.memory_space<vmem>>, %arg6: memref<1x128xf32, #tpu.memory_space<vmem>>, %arg7: memref<8x128xf32, #tpu.memory_space<vmem>>) attributes {dimension_semantics = [#tpu.dimension_semantics<parallel>], iteration_bounds = array<i64: 1>, scalar_prefetch = 0 : i64, scratch_operands = 0 : i64, tpu.core_type = #tpu.core_type<tc>, window_params = [{transform_indices = @transform_0, window_bounds = array<i64: 8, 32>}, {pipeline_mode = #tpu.pipeline_mode<synchronous>, transform_indices = @transform_1, window_bounds = array<i64: 32, 128>}, {pipeline_mode = #tpu.pipeline_mode<synchronous>, transform_indices = @transform_2, window_bounds = array<i64: 128, 128>}, {pipeline_mode = #tpu.pipeline_mode<synchronous>, transform_indices = @transform_3, window_bounds = array<i64: 1, 128>}, {pipeline_mode = #tpu.pipeline_mode<synchronous>, transform_indices = @transform_4, window_bounds = array<i64: 128, 128>}, {pipeline_mode = #tpu.pipeline_mode<synchronous>, transform_indices = @transform_5, window_bounds = array<i64: 1, 128>}, {transform_indices = @transform_6, window_bounds = array<i64: 8, 128>}]} {
    %c0 = arith.constant 0 : index
    %c0_0 = arith.constant 0 : index
    %0 = vector.load %arg1[%c0, %c0_0] : memref<8x32xf32, #tpu.memory_space<vmem>>, vector<8x32xf32>
    %c0_1 = arith.constant 0 : index
    %c0_2 = arith.constant 0 : index
    %1 = vector.load %arg2[%c0_1, %c0_2] : memref<32x128xf32, #tpu.memory_space<vmem>>, vector<32x128xf32>
    %cst = arith.constant dense<0.000000e+00> : vector<8x128xf32>
    %2 = tpu.matmul %0, %1, %cst {dimension_numbers = #tpu.dot_dimension_numbers<[1], [0], [0], [1], [0, 0, 1, 1], [], []>} : vector<8x32xf32>, vector<32x128xf32>, vector<8x128xf32> -> vector<8x128xf32>
    %c0_3 = arith.constant 0 : index
    %c0_4 = arith.constant 0 : index
    %3 = vector.load %arg4[%c0_3, %c0_4] : memref<1x128xf32, #tpu.memory_space<vmem>>, vector<1x128xf32>
    %4 = vector.broadcast %3 : vector<1x128xf32> to vector<8x128xf32>
    %5 = arith.addf %2, %4 : vector<8x128xf32>
    %cst_5 = arith.constant 0.000000e+00 : f32
    %6 = vector.broadcast %cst_5 : f32 to vector<8x128xf32>
    %7 = arith.maximumf %5, %6 : vector<8x128xf32>
    %c0_6 = arith.constant 0 : index
    %c0_7 = arith.constant 0 : index
    %8 = vector.load %arg3[%c0_6, %c0_7] : memref<128x128xf32, #tpu.memory_space<vmem>>, vector<128x128xf32>
    %cst_8 = arith.constant dense<0.000000e+00> : vector<8x128xf32>
    %9 = tpu.matmul %7, %8, %cst_8 {dimension_numbers = #tpu.dot_dimension_numbers<[1], [0], [0], [1], [0, 0, 1, 1], [], []>} : vector<8x128xf32>, vector<128x128xf32>, vector<8x128xf32> -> vector<8x128xf32>
    %c0_9 = arith.constant 0 : index
    %c0_10 = arith.constant 0 : index
    %10 = vector.load %arg4[%c0_9, %c0_10] : memref<1x128xf32, #tpu.memory_space<vmem>>, vector<1x128xf32>
    %11 = vector.broadcast %10 : vector<1x128xf32> to vector<8x128xf32>
    %12 = arith.addf %9, %11 : vector<8x128xf32>
    %cst_11 = arith.constant 0.000000e+00 : f32
    %13 = vector.broadcast %cst_11 : f32 to vector<8x128xf32>
    %14 = arith.maximumf %12, %13 : vector<8x128xf32>
    %c0_12 = arith.constant 0 : index
    %c0_13 = arith.constant 0 : index
    %15 = vector.load %arg5[%c0_12, %c0_13] : memref<128x128xf32, #tpu.memory_space<vmem>>, vector<128x128xf32>
    %cst_14 = arith.constant dense<0.000000e+00> : vector<8x128xf32>
    %16 = tpu.matmul %14, %15, %cst_14 {dimension_numbers = #tpu.dot_dimension_numbers<[1], [0], [0], [1], [0, 0, 1, 1], [], []>} : vector<8x128xf32>, vector<128x128xf32>, vector<8x128xf32> -> vector<8x128xf32>
    %c0_15 = arith.constant 0 : index
    %c0_16 = arith.constant 0 : index
    %17 = vector.load %arg6[%c0_15, %c0_16] : memref<1x128xf32, #tpu.memory_space<vmem>>, vector<1x128xf32>
    %18 = vector.broadcast %17 : vector<1x128xf32> to vector<8x128xf32>
    %19 = arith.addf %16, %18 : vector<8x128xf32>
    %c0_17 = arith.constant 0 : index
    %c0_18 = arith.constant 0 : index
    %20 = vector.load %arg7[%c0_17, %c0_18] : memref<8x128xf32, #tpu.memory_space<vmem>>, vector<8x128xf32>
    tpu.vector_store %arg7[%c0_17, %c0_18], %19 {strides = array<i32>} : memref<8x128xf32, #tpu.memory_space<vmem>>, vector<8x128xf32>,
    return
  }
  func.func @transform_0(%arg0: i32) -> (i32, i32) {
    %c0_i32 = arith.constant 0 : i32
    %c0_i32_0 = arith.constant 0 : i32
    return %arg0, %c0_i32 : i32, i32
  }
  func.func @transform_1(%arg0: i32) -> (i32, i32) {
    %c0_i32 = arith.constant 0 : i32
    %c0_i32_0 = arith.constant 0 : i32
    %c0_i32_1 = arith.constant 0 : i32
    return %c0_i32, %c0_i32_0 : i32, i32
  }
  func.func @transform_2(%arg0: i32) -> (i32, i32) {
    %c0_i32 = arith.constant 0 : i32
    %c0_i32_0 = arith.constant 0 : i32
    %c0_i32_1 = arith.constant 0 : i32
    return %c0_i32, %c0_i32_0 : i32, i32
  }
  func.func @transform_3(%arg0: i32) -> (i32, i32) {
    %c0_i32 = arith.constant 0 : i32
    %c0_i32_0 = arith.constant 0 : i32
    %c0_i32_1 = arith.constant 0 : i32
    return %c0_i32, %c0_i32_0 : i32, i32
  }
  func.func @transform_4(%arg0: i32) -> (i32, i32) {
    %c0_i32 = arith.constant 0 : i32
    %c0_i32_0 = arith.constant 0 : i32
    %c0_i32_1 = arith.constant 0 : i32
    return %c0_i32, %c0_i32_0 : i32, i32
  }
  func.func @transform_5(%arg0: i32) -> (i32, i32) {
    %c0_i32 = arith.constant 0 : i32
    %c0_i32_0 = arith.constant 0 : i32
    %c0_i32_1 = arith.constant 0 : i32
    return %c0_i32, %c0_i32_0 : i32, i32
  }
  func.func @transform_6(%arg0: i32) -> (i32, i32) {
    %c0_i32 = arith.constant 0 : i32
    %c0_i32_0 = arith.constant 0 : i32
    return %arg0, %c0_i32 : i32, i32
  }
}

</mosaic_0001>

<llo_original>
// kernel: multi_mlp_forward.1
$region0: #{multi_mlp_forward.1}
  #allocation0 [shape = 'u32[]', space=smem, size = 0x4, offset = 0x4, fixed_abs, tag = 'smem constant byte address 0x4 - core index']
  #allocation1 [shape = 'u32[72,128]{1,0:T(1,128)}', space=vmem, size = 0x9000, scoped, tag = 'internal scratch']
  %s0 = inlined_call_operand.hbm [shape: f32[8,32], index: 0, kind: input, shape index: {}]
  %s1 = inlined_call_operand.hbm [shape: f32[32,128], index: 1, kind: input, shape index: {}]
  %s2 = inlined_call_operand.hbm [shape: f32[128,128], index: 2, kind: input, shape index: {}]
  %s3 = inlined_call_operand.vmem [shape: f32[1,128], index: 3, kind: input, shape index: {}]
  %s4 = inlined_call_operand.hbm [shape: f32[128,128], index: 4, kind: input, shape index: {}]
  %s5 = inlined_call_operand.vmem [shape: f32[1,128], index: 5, kind: input, shape index: {}]
  %s6 = inlined_call_operand.vmem [shape: f32[8,128], index: 6, kind: output, shape index: {}]
  %s7 = sld [smem:[#allocation0]]
  $region50: #{multi_mlp_forward.1} parent=0
    _
  %s9 = ssub.s32 1, %s7
  %s10 = scalar_select 0, %s9, %s7
  $region1: #{multi_mlp_forward.1} parent=0
    #allocation2 [shape = 'u8[4096]{0}', space=vmem, size = 0x1000, scoped, tag = 'input window, operand 0, single buffered']
    #allocation3 [shape = 's32[1]{0}', space=sflag, size = 0x4, scoped, tag = 'scoped memory for multi_mlp_forward.1']
    #allocation4 [shape = 'u8[16384]{0}', space=vmem, size = 0x4000, scoped, tag = 'input window, operand 1, single buffered']
    #allocation5 [shape = 's32[1]{0}', space=sflag, size = 0x4, scoped, tag = 'scoped memory for multi_mlp_forward.1']
    #allocation6 [shape = 'u8[65536]{0}', space=vmem, size = 0x10000, scoped, tag = 'input window, operand 2, single buffered']
    #allocation7 [shape = 'u8[65536]{0}', space=vmem, size = 0x10000, scoped, tag = 'input window, operand 4, single buffered']
    #allocation8 [shape = 's32[1]{0}', space=sflag, size = 0x4, scoped, tag = 'scoped memory for multi_mlp_forward.1']
    %11 = vsyncpa [#allocation3], 0
    %12 = vsyncpa [#allocation5], 0
    %13 = vsyncpa [#allocation8], 0
    // Predicated region
    $region2: #{multi_mlp_forward.1} parent=1 // pred_check
      _
    $region3: #{multi_mlp_forward.1} parent=1 // pred_check_branch
      %15 = sbr.rel (0) target = $region5
    $region4: #{multi_mlp_forward.1} parent=1 // pred_region
      %17 = vsyncadd [#allocation3], 0
      %s19 = sshll.u32 %s0, 4
      %s20 = int_to_ptr.hbm [resolvable:$true] %s19
      %s21 = sshll.u32 [#allocation2], 4
      %s22 = int_to_ptr.vmem [resolvable:$true] %s21
      %24 = dma.hbm_to_vmem [thread:$0]  %s20, 128, %s22, [#allocation3]
    $region5: #{multi_mlp_forward.1} parent=1 // pred_fallthru
      _
    // Predicated region
    $region6: #{multi_mlp_forward.1} parent=1 // pred_check
      _
    $region7: #{multi_mlp_forward.1} parent=1 // pred_check_branch
      %26 = sbr.rel (0) target = $region9
    $region8: #{multi_mlp_forward.1} parent=1 // pred_region
      %28 = vsyncadd [#allocation5], 0
      %s29 = sshll.u32 %s1, 4
      %s30 = int_to_ptr.hbm [resolvable:$true] %s29
      %s31 = sshll.u32 [#allocation4], 4
      %s32 = int_to_ptr.vmem [resolvable:$true] %s31
      %37 = dma.hbm_to_vmem [thread:$0]  %s30, 512, %s32, [#allocation5], 128, 128, 8
    $region9: #{multi_mlp_forward.1} parent=1 // pred_fallthru
      _
    // Predicated region
    $region10: #{multi_mlp_forward.1} parent=1 // pred_check
      _
    $region11: #{multi_mlp_forward.1} parent=1 // pred_check_branch
      %39 = sbr.rel (0) target = $region13
    $region12: #{multi_mlp_forward.1} parent=1 // pred_region
      %41 = vsyncadd [#allocation5], 0
      %s42 = sshll.u32 %s2, 4
      %s43 = int_to_ptr.hbm [resolvable:$true] %s42
      %s44 = sshll.u32 [#allocation6], 4
      %s45 = int_to_ptr.vmem [resolvable:$true] %s44
      %50 = dma.hbm_to_vmem [thread:$0]  %s43, 2048, %s45, [#allocation5], 128, 128, 8
    $region13: #{multi_mlp_forward.1} parent=1 // pred_fallthru
      _
    // Predicated region
    $region14: #{multi_mlp_forward.1} parent=1 // pred_check
      _
    $region15: #{multi_mlp_forward.1} parent=1 // pred_check_branch
      %52 = sbr.rel (0) target = $region17
    $region16: #{multi_mlp_forward.1} parent=1 // pred_region
      _
    $region17: #{multi_mlp_forward.1} parent=1 // pred_fallthru
      _
    // Predicated region
    $region18: #{multi_mlp_forward.1} parent=1 // pred_check
      _
    $region19: #{multi_mlp_forward.1} parent=1 // pred_check_branch
      %54 = sbr.rel (0) target = $region21
    $region20: #{multi_mlp_forward.1} parent=1 // pred_region
      %56 = vsyncadd [#allocation8], 0
      %s57 = sshll.u32 %s4, 4
      %s58 = int_to_ptr.hbm [resolvable:$true] %s57
      %s59 = sshll.u32 [#allocation7], 4
      %s60 = int_to_ptr.vmem [resolvable:$true] %s59
      %65 = dma.hbm_to_vmem [thread:$0]  %s58, 2048, %s60, [#allocation8], 128, 128, 8
    $region21: #{multi_mlp_forward.1} parent=1 // pred_fallthru
      _
    // Predicated region
    $region22: #{multi_mlp_forward.1} parent=1 // pred_check
      _
    $region23: #{multi_mlp_forward.1} parent=1 // pred_check_branch
      %67 = sbr.rel (0) target = $region25
    $region24: #{multi_mlp_forward.1} parent=1 // pred_region
      _
    $region25: #{multi_mlp_forward.1} parent=1 // pred_fallthru
      _
    // Predicated region
    $region26: #{multi_mlp_forward.1} parent=1 // pred_check
      _
    $region27: #{multi_mlp_forward.1} parent=1 // pred_check_branch
      %69 = sbr.rel (0) target = $region29
    $region28: #{multi_mlp_forward.1} parent=1 // pred_region
      %71 = dma.done [#allocation3], 128
    $region29: #{multi_mlp_forward.1} parent=1 // pred_fallthru
      _
    // Predicated region
    $region30: #{multi_mlp_forward.1} parent=1 // pred_check
      _
    $region31: #{multi_mlp_forward.1} parent=1 // pred_check_branch
      %73 = sbr.rel (0) target = $region33
    $region32: #{multi_mlp_forward.1} parent=1 // pred_region
      %75 = dma.done [#allocation5], 512
    $region33: #{multi_mlp_forward.1} parent=1 // pred_fallthru
      _
    // Predicated region
    $region34: #{multi_mlp_forward.1} parent=1 // pred_check
      _
    $region35: #{multi_mlp_forward.1} parent=1 // pred_check_branch
      %77 = sbr.rel (0) target = $region37
    $region36: #{multi_mlp_forward.1} parent=1 // pred_region
      %79 = dma.done [#allocation5], 2048
    $region37: #{multi_mlp_forward.1} parent=1 // pred_fallthru
      _
    // Predicated region
    $region38: #{multi_mlp_forward.1} parent=1 // pred_check
      _
    $region39: #{multi_mlp_forward.1} parent=1 // pred_check_branch
      %81 = sbr.rel (0) target = $region41
    $region40: #{multi_mlp_forward.1} parent=1 // pred_region
      %83 = dma.done [#allocation8], 2048
    $region41: #{multi_mlp_forward.1} parent=1 // pred_fallthru
      _
    %v84 = vld [vmem:[#allocation2] sm:$0xff]
    %v85 = vld [vmem:[#allocation4] sm:$0xff]
    %v86 = vld [vmem:[#allocation4 + $0x8] sm:$0xff]
    %v87 = vld [vmem:[#allocation4 + $0x10] sm:$0xff]
    %v88 = vld [vmem:[#allocation4 + $0x18] sm:$0xff]
    %v89 = vld [vmem:[%s3] sm:$0x1]
    %v91 = vperm.slane %v89, 0
    %vm93 = vcmask 261120
    %v95 = vsel %vm93, %v84, 0
    %97 = vmatpush.msra.mxu0 0.0
    %98 = vmatpush.msra.mxu0 0.0
    %99 = vmatpush.msra.mxu0 0.0
    %100 = vmatpush.msra.mxu0 0.0
    %101 = vmatpush.msra.mxu0 0.0
    %102 = vmatpush.msra.mxu0 0.0
    %103 = vmatpush.msra.mxu0 0.0
    %104 = vmatpush.msra.mxu0 0.0
    %105 = vmatpush.msra.mxu0 0.0
    %106 = vmatpush.msra.mxu0 0.0
    %107 = vmatpush.msra.mxu0 0.0
    %108 = vmatpush.msra.mxu0 0.0
    %109 = vmatpush.msra.mxu0 %v88
    %110 = vmatpush.msra.mxu0 %v87
    %111 = vmatpush.msra.mxu0 %v86
    %112 = vmatpush.msra.mxu0 %v85
    %113 = vmatmul.f32.gmra.mxu0 %v95
    %v114 = vpop.f32.mrf.mxu0
    %v115 = vadd.f32 %v91, %v114
    %116 = vdwg.mxu0
    %v117 = vmax.f32 %v115, 0.0
    %v118 = vld [vmem:[#allocation6] sm:$0xff]
    %v119 = vld [vmem:[#allocation6 + $0x8] sm:$0xff]
    %v120 = vld [vmem:[#allocation6 + $0x10] sm:$0xff]
    %v121 = vld [vmem:[#allocation6 + $0x18] sm:$0xff]
    %v122 = vld [vmem:[#allocation6 + $0x20] sm:$0xff]
    %v123 = vld [vmem:[#allocation6 + $0x28] sm:$0xff]
    %v124 = vld [vmem:[#allocation6 + $0x30] sm:$0xff]
    %v125 = vld [vmem:[#allocation6 + $0x38] sm:$0xff]
    %v126 = vld [vmem:[#allocation6 + $0x40] sm:$0xff]
    %v127 = vld [vmem:[#allocation6 + $0x48] sm:$0xff]
    %v128 = vld [vmem:[#allocation6 + $0x50] sm:$0xff]
    %v129 = vld [vmem:[#allocation6 + $0x58] sm:$0xff]
    %v130 = vld [vmem:[#allocation6 + $0x60] sm:$0xff]
    %v131 = vld [vmem:[#allocation6 + $0x68] sm:$0xff]
    %v132 = vld [vmem:[#allocation6 + $0x70] sm:$0xff]
    %v133 = vld [vmem:[#allocation6 + $0x78] sm:$0xff]
    %134 = vmatpush.msra.mxu0 %v133
    %135 = vmatpush.msra.mxu0 %v132
    %136 = vmatpush.msra.mxu0 %v131
    %137 = vmatpush.msra.mxu0 %v130
    %138 = vmatpush.msra.mxu0 %v129
    %139 = vmatpush.msra.mxu0 %v128
    %140 = vmatpush.msra.mxu0 %v127
    %141 = vmatpush.msra.mxu0 %v126
    %142 = vmatpush.msra.mxu0 %v125
    %143 = vmatpush.msra.mxu0 %v124
    %144 = vmatpush.msra.mxu0 %v123
    %145 = vmatpush.msra.mxu0 %v122
    %146 = vmatpush.msra.mxu0 %v121
    %147 = vmatpush.msra.mxu0 %v120
    %148 = vmatpush.msra.mxu0 %v119
    %149 = vmatpush.msra.mxu0 %v118
    %150 = vmatmul.f32.gmra.mxu0 %v117
    %v151 = vpop.f32.mrf.mxu0
    %v152 = vadd.f32 %v91, %v151
    %153 = vdwg.mxu0
    %v154 = vmax.f32 %v152, 0.0
    %v155 = vld [vmem:[#allocation7] sm:$0xff]
    %v156 = vld [vmem:[#allocation7 + $0x8] sm:$0xff]
    %v157 = vld [vmem:[#allocation7 + $0x10] sm:$0xff]
    %v158 = vld [vmem:[#allocation7 + $0x18] sm:$0xff]
    %v159 = vld [vmem:[#allocation7 + $0x20] sm:$0xff]
    %v160 = vld [vmem:[#allocation7 + $0x28] sm:$0xff]
    %v161 = vld [vmem:[#allocation7 + $0x30] sm:$0xff]
    %v162 = vld [vmem:[#allocation7 + $0x38] sm:$0xff]
    %v163 = vld [vmem:[#allocation7 + $0x40] sm:$0xff]
    %v164 = vld [vmem:[#allocation7 + $0x48] sm:$0xff]
    %v165 = vld [vmem:[#allocation7 + $0x50] sm:$0xff]
    %v166 = vld [vmem:[#allocation7 + $0x58] sm:$0xff]
    %v167 = vld [vmem:[#allocation7 + $0x60] sm:$0xff]
    %v168 = vld [vmem:[#allocation7 + $0x68] sm:$0xff]
    %v169 = vld [vmem:[#allocation7 + $0x70] sm:$0xff]
    %v170 = vld [vmem:[#allocation7 + $0x78] sm:$0xff]
    %v171 = vld [vmem:[%s5] sm:$0x1]
    %v173 = vperm.slane %v171, 0
    %175 = vmatpush.msra.mxu0 %v170
    %176 = vmatpush.msra.mxu0 %v169
    %177 = vmatpush.msra.mxu0 %v168
    %178 = vmatpush.msra.mxu0 %v167
    %179 = vmatpush.msra.mxu0 %v166
    %180 = vmatpush.msra.mxu0 %v165
    %181 = vmatpush.msra.mxu0 %v164
    %182 = vmatpush.msra.mxu0 %v163
    %183 = vmatpush.msra.mxu0 %v162
    %184 = vmatpush.msra.mxu0 %v161
    %185 = vmatpush.msra.mxu0 %v160
    %186 = vmatpush.msra.mxu0 %v159
    %187 = vmatpush.msra.mxu0 %v158
    %188 = vmatpush.msra.mxu0 %v157
    %189 = vmatpush.msra.mxu0 %v156
    %190 = vmatpush.msra.mxu0 %v155
    %191 = vmatmul.f32.gmra.mxu0 %v154
    %v192 = vpop.f32.mrf.mxu0
    %v193 = vadd.f32 %v173, %v192
    %194 = vdwg.mxu0
    %195 = vst [vmem:[%s6] sm:$0xff] %v193
    // Predicated region
    $region42: #{multi_mlp_forward.1} parent=1 // pred_check
      _
    $region43: #{multi_mlp_forward.1} parent=1 // pred_check_branch
      %197 = sbr.rel (0) target = $region45
    $region44: #{multi_mlp_forward.1} parent=1 // pred_region
      _
    $region45: #{multi_mlp_forward.1} parent=1 // pred_fallthru
      _
    // Predicated region
    $region46: #{multi_mlp_forward.1} parent=1 // pred_check
      _
    $region47: #{multi_mlp_forward.1} parent=1 // pred_check_branch
      %199 = sbr.rel (0) target = $region49
    $region48: #{multi_mlp_forward.1} parent=1 // pred_region
      _
    $region49: #{multi_mlp_forward.1} parent=1 // pred_fallthru
      _
    %200 = vsyncpa [#allocation3], 1
    %201 = vsyncpa [#allocation5], 1
    %202 = vsyncpa [#allocation8], 1

</llo_original>
